<compile_context>
chip_gen: v7x
topology: tpu7x:2x2x1
jax: 0.10.0
libtpu: 0.0.40
codegen_flags: <defaults>
</compile_context>

<pallas_src>
import jax
import jax.numpy as jnp
from jax.experimental import pallas as pl
from jax.experimental.pallas import tpu as pltpu

_LANE = 128
_SUBLANE = 8
_F = 16  # in_features of fc1


def _linear_kernel(x_ref, m_ref, o_ref):
    # x_ref: (tb, 128) -- each row packs 8 consecutive batch rows (16 feats each).
    # m_ref: (128, 8)  -- kron(I_8, w_col): block-diagonal weight column.
    # o_ref: (tb, 8)   -- 8 outputs per slab row (one per packed batch row).
    o_ref[...] = jnp.dot(
        x_ref[...], m_ref[...], preferred_element_type=jnp.float32
    ).astype(o_ref.dtype)


def _choose_tile_rows(n_rows, cap_rows):
    """Pick the slab-row tile: big (MiB-scale) but with >=2 grid steps if possible."""
    if n_rows <= _SUBLANE:
        return n_rows  # full-extent block (allowed even when not 8-aligned)
    half = pl.cdiv(n_rows, 2)                     # >=2 steps -> both TCs on v7x
    half = pl.cdiv(half, _SUBLANE) * _SUBLANE     # keep sublane alignment
    return max(_SUBLANE, min(cap_rows, half))


def network_forward(x, weight, *, cap_rows=8192):
    """Pallas equivalent of Network.forward (nn.Linear(16, 1, bias=False)).

    x: (B, 16), weight: (1, 16).  Returns (B, 1) = x @ weight.T.
    """
    B, F = x.shape
    assert F == _F
    assert weight.shape == (1, F)

    main = (B // _SUBLANE) * _SUBLANE
    pieces = []

    if main > 0:
        n_rows = main // _SUBLANE
        # Free reshape: contiguous f32 row-major (main, 16) -> (main/8, 128).
        slab = x[:main].reshape(n_rows, _SUBLANE * F)
        # Block-diagonal weight so slab_row @ m = 8 independent dot(x_i, w).
        m = jnp.kron(jnp.eye(_SUBLANE, dtype=x.dtype), weight.T.astype(x.dtype))

        tb = _choose_tile_rows(n_rows, cap_rows)
        grid = (pl.cdiv(n_rows, tb),)

        out = pl.pallas_call(
            _linear_kernel,
            out_shape=jax.ShapeDtypeStruct((n_rows, _SUBLANE), x.dtype),
            grid_spec=pl.GridSpec(
                grid=grid,
                in_specs=[
                    pl.BlockSpec((tb, _SUBLANE * F), lambda i: (i, 0)),
                    pl.BlockSpec((_SUBLANE * F, _SUBLANE), lambda i: (0, 0)),
                ],
                out_specs=pl.BlockSpec((tb, _SUBLANE), lambda i: (i, 0)),
            ),
            compiler_params=pltpu.CompilerParams(
                dimension_semantics=("parallel",),
                vmem_limit_bytes=32 * 1024 * 1024,
            ),
            cost_estimate=pl.CostEstimate(
                flops=2 * n_rows * (_SUBLANE * F) * _SUBLANE,
                transcendentals=0,
                bytes_accessed=(main * F + (_SUBLANE * F) * _SUBLANE + main)
                * x.dtype.itemsize,
            ),
        )(slab, m)
        pieces.append(out.reshape(main, 1))

    if main < B:
        # TODO(synk): <8 leftover batch rows are too small for a TPU tile; they
        # are handled with a trivial plain-JAX matmul (negligible cost).
        pieces.append(x[main:] @ weight.T.astype(x.dtype))

    return pieces[0] if len(pieces) == 1 else jnp.concatenate(pieces, axis=0)


if __name__ == "__main__":
    key = jax.random.PRNGKey(0)
    kx, kw = jax.random.split(key)

    in_features = 16
    weight = jax.random.normal(kw, (1, in_features), dtype=jnp.float32) * 0.1

    # Small demo shape matching nn.Linear(16, 1, bias=False).
    batch = 8
    x = jax.random.normal(kx, (batch, in_features), dtype=jnp.float32)
    out = jax.block_until_ready(network_forward(x, weight))
    ref = x @ weight.T
    assert out.shape == (batch, 1)
    assert jnp.allclose(out, ref, atol=1e-5, rtol=1e-5)

    # Multi-tile path: grid of 2 "parallel" steps (v7x two-TC split).
    batch2 = 512
    x2 = jax.random.normal(kx, (batch2, in_features), dtype=jnp.float32)
    out2 = jax.block_until_ready(network_forward(x2, weight))
    ref2 = x2 @ weight.T
    assert out2.shape == (batch2, 1)
    assert jnp.allclose(out2, ref2, atol=1e-5, rtol=1e-5)

    # Ragged batch: partial (masked) last block + <8-row plain-JAX tail.
    batch3 = 103
    x3 = jax.random.normal(kx, (batch3, in_features), dtype=jnp.float32)
    out3 = jax.block_until_ready(network_forward(x3, weight))
    ref3 = x3 @ weight.T
    assert out3.shape == (batch3, 1)
    assert jnp.allclose(out3, ref3, atol=1e-5, rtol=1e-5)

    print("KERNEL_OK")
</pallas_src>

<mosaic_0001>
module attributes {stable_mosaic.version = 11 : i64} {
  func.func @_linear_kernel(%arg0: i32, %arg1: memref<1x128xf32, #tpu.memory_space<vmem>>, %arg2: memref<128x8xf32, #tpu.memory_space<vmem>>, %arg3: memref<1x8xf32, #tpu.memory_space<vmem>>) attributes {dimension_semantics = [#tpu.dimension_semantics<parallel>], iteration_bounds = array<i64: 1>, scalar_prefetch = 0 : i64, scratch_operands = 0 : i64, tpu.core_type = #tpu.core_type<tc>, window_params = [{transform_indices = @transform_0, window_bounds = array<i64: 1, 128>}, {pipeline_mode = #tpu.pipeline_mode<synchronous>, transform_indices = @transform_1, window_bounds = array<i64: 128, 8>}, {transform_indices = @transform_2, window_bounds = array<i64: 1, 8>}]} {
    %c0 = arith.constant 0 : index
    %c0_0 = arith.constant 0 : index
    %0 = vector.load %arg1[%c0, %c0_0] : memref<1x128xf32, #tpu.memory_space<vmem>>, vector<1x128xf32>
    %c0_1 = arith.constant 0 : index
    %c0_2 = arith.constant 0 : index
    %1 = vector.load %arg2[%c0_1, %c0_2] : memref<128x8xf32, #tpu.memory_space<vmem>>, vector<128x8xf32>
    %cst = arith.constant dense<0.000000e+00> : vector<1x8xf32>
    %2 = tpu.matmul %0, %1, %cst {dimension_numbers = #tpu.dot_dimension_numbers<[1], [0], [0], [1], [0, 0, 1, 1], [], []>} : vector<1x128xf32>, vector<128x8xf32>, vector<1x8xf32> -> vector<1x8xf32>
    %c0_3 = arith.constant 0 : index
    %c0_4 = arith.constant 0 : index
    %3 = vector.load %arg3[%c0_3, %c0_4] : memref<1x8xf32, #tpu.memory_space<vmem>>, vector<1x8xf32>
    tpu.vector_store %arg3[%c0_3, %c0_4], %2 {strides = array<i32>} : memref<1x8xf32, #tpu.memory_space<vmem>>, vector<1x8xf32>,
    return
  }
  func.func @transform_0(%arg0: i32) -> (i32, i32) {
    %c0_i32 = arith.constant 0 : i32
    %c0_i32_0 = arith.constant 0 : i32
    return %arg0, %c0_i32 : i32, i32
  }
  func.func @transform_1(%arg0: i32) -> (i32, i32) {
    %c0_i32 = arith.constant 0 : i32
    %c0_i32_0 = arith.constant 0 : i32
    %c0_i32_1 = arith.constant 0 : i32
    return %c0_i32, %c0_i32_0 : i32, i32
  }
  func.func @transform_2(%arg0: i32) -> (i32, i32) {
    %c0_i32 = arith.constant 0 : i32
    %c0_i32_0 = arith.constant 0 : i32
    return %arg0, %c0_i32 : i32, i32
  }
}

</mosaic_0001>

<llo_original>
// kernel: tpu_custom_call.1
$region0: #{tpu_custom_call.1}
  #allocation0 [shape = 'u32[]', space=smem, size = 0x4, offset = 0x4, fixed_abs, tag = 'smem constant byte address 0x4 - core index']
  #allocation1 [shape = 'u32[144,128]{1,0:T(1,128)}', space=vmem, size = 0x12000, scoped, tag = 'internal scratch']
  %s0 = inlined_call_operand.vmem [shape: f32[1,128], index: 0, kind: input, shape index: {}]
  %s1 = inlined_call_operand.vmem [shape: f32[128,8], index: 1, kind: input, shape index: {}]
  %s2 = inlined_call_operand.hbm [shape: f32[1,8], index: 2, kind: output, shape index: {}]
  %s3 = sld [smem:[#allocation0]]
  $region18: #{tpu_custom_call.1} parent=0
    _
  %s5 = ssub.s32 1, %s3
  %s6 = scalar_select 0, %s5, %s3
  $region1: #{tpu_custom_call.1} parent=0
    #allocation2 [shape = 'u8[512]{0}', space=vmem, size = 0x400, scoped, tag = 'output window, operand 0, single buffered']
    #allocation3 [shape = 's32[1]{0}', space=sflag, size = 0x4, scoped, tag = 'scoped memory for tpu_custom_call.1']
    %7 = vsyncpa [#allocation3], 0
    // Predicated region
    $region2: #{tpu_custom_call.1} parent=1 // pred_check
      _
    $region3: #{tpu_custom_call.1} parent=1 // pred_check_branch
      %9 = sbr.rel (0) target = $region5
    $region4: #{tpu_custom_call.1} parent=1 // pred_region
      _
    $region5: #{tpu_custom_call.1} parent=1 // pred_fallthru
      _
    // Predicated region
    $region6: #{tpu_custom_call.1} parent=1 // pred_check
      _
    $region7: #{tpu_custom_call.1} parent=1 // pred_check_branch
      %11 = sbr.rel (0) target = $region9
    $region8: #{tpu_custom_call.1} parent=1 // pred_region
      _
    $region9: #{tpu_custom_call.1} parent=1 // pred_fallthru
      _
    %v12 = vld [vmem:[%s0] sm:$0x1]
    %v13 = vld [vmem:[%s1] sm:$0xff]
    %v14 = vld [vmem:[%s1 + $0x8] sm:$0xff]
    %v15 = vld [vmem:[%s1 + $0x10] sm:$0xff]
    %v16 = vld [vmem:[%s1 + $0x18] sm:$0xff]
    %v17 = vld [vmem:[%s1 + $0x20] sm:$0xff]
    %v18 = vld [vmem:[%s1 + $0x28] sm:$0xff]
    %v19 = vld [vmem:[%s1 + $0x30] sm:$0xff]
    %v20 = vld [vmem:[%s1 + $0x38] sm:$0xff]
    %v21 = vld [vmem:[%s1 + $0x40] sm:$0xff]
    %v22 = vld [vmem:[%s1 + $0x48] sm:$0xff]
    %v23 = vld [vmem:[%s1 + $0x50] sm:$0xff]
    %v24 = vld [vmem:[%s1 + $0x58] sm:$0xff]
    %v25 = vld [vmem:[%s1 + $0x60] sm:$0xff]
    %v26 = vld [vmem:[%s1 + $0x68] sm:$0xff]
    %v27 = vld [vmem:[%s1 + $0x70] sm:$0xff]
    %v28 = vld [vmem:[%s1 + $0x78] sm:$0xff]
    %29 = vmatprep.subr.mxu0 0.0
    %30 = vmatpush1.msra.mxu0 %v13
    %31 = vmatprep.subr.mxu0 0.0
    %32 = vmatpush1.msra.mxu0 %v14
    %33 = vmatprep.subr.mxu0 0.0
    %34 = vmatpush1.msra.mxu0 %v15
    %35 = vmatprep.subr.mxu0 0.0
    %36 = vmatpush1.msra.mxu0 %v16
    %37 = vmatprep.subr.mxu0 0.0
    %38 = vmatpush1.msra.mxu0 %v17
    %39 = vmatprep.subr.mxu0 0.0
    %40 = vmatpush1.msra.mxu0 %v18
    %41 = vmatprep.subr.mxu0 0.0
    %42 = vmatpush1.msra.mxu0 %v19
    %43 = vmatprep.subr.mxu0 0.0
    %44 = vmatpush1.msra.mxu0 %v20
    %45 = vmatprep.subr.mxu0 0.0
    %46 = vmatpush1.msra.mxu0 %v21
    %47 = vmatprep.subr.mxu0 0.0
    %48 = vmatpush1.msra.mxu0 %v22
    %49 = vmatprep.subr.mxu0 0.0
    %50 = vmatpush1.msra.mxu0 %v23
    %51 = vmatprep.subr.mxu0 0.0
    %52 = vmatpush1.msra.mxu0 %v24
    %53 = vmatprep.subr.mxu0 0.0
    %54 = vmatpush1.msra.mxu0 %v25
    %55 = vmatprep.subr.mxu0 0.0
    %56 = vmatpush1.msra.mxu0 %v26
    %57 = vmatprep.subr.mxu0 0.0
    %58 = vmatpush1.msra.mxu0 %v27
    %59 = vmatprep.subr.mxu0 0.0
    %60 = vmatpush1.msra.mxu0 %v28
    %61 = vmatprep.subr.mxu0 0.0
    %62 = vmatpush1.msra.mxu0 0.0
    %63 = vmatprep.subr.mxu0 0.0
    %64 = vmatpush1.msra.mxu0 0.0
    %65 = vmatprep.subr.mxu0 0.0
    %66 = vmatpush1.msra.mxu0 0.0
    %67 = vmatprep.subr.mxu0 0.0
    %68 = vmatpush1.msra.mxu0 0.0
    %69 = vmatprep.subr.mxu0 0.0
    %70 = vmatpush1.msra.mxu0 0.0
    %71 = vmatprep.subr.mxu0 0.0
    %72 = vmatpush1.msra.mxu0 0.0
    %73 = vmatprep.subr.mxu0 0.0
    %74 = vmatpush1.msra.mxu0 0.0
    %75 = vmatprep.subr.mxu0 0.0
    %76 = vmatpush1.msra.mxu0 0.0
    %77 = vmatprep.subr.mxu0 0.0
    %78 = vmatpush1.msra.mxu0 0.0
    %79 = vmatprep.subr.mxu0 0.0
    %80 = vmatpush1.msra.mxu0 0.0
    %81 = vmatprep.subr.mxu0 0.0
    %82 = vmatpush1.msra.mxu0 0.0
    %83 = vmatprep.subr.mxu0 0.0
    %84 = vmatpush1.msra.mxu0 0.0
    %85 = vmatprep.subr.mxu0 0.0
    %86 = vmatpush1.msra.mxu0 0.0
    %87 = vmatprep.subr.mxu0 0.0
    %88 = vmatpush1.msra.mxu0 0.0
    %89 = vmatprep.subr.mxu0 0.0
    %90 = vmatpush1.msra.mxu0 0.0
    %91 = vmatprep.subr.mxu0 0.0
    %92 = vmatpush1.msra.mxu0 0.0
    %93 = vmatprep.mubr.f32.mxu0 0.0
    %94 = vmatmul.mubr.f32.gmra.mrb[0].mxu0 %v12
    %v95 = vpop.f32.mrb[0].mxu0
    %v96 = vadd.f32 0.0, %v95
    %v97 = vpop.f32.mrb[0].mxu0
    %98 = vdwg.mxu0
    %vm99 = vcmask 57344
    %100 = vst.msk [vmem:[#allocation2] sm:$0x1] %vm99, %v96
    // Predicated region
    $region10: #{tpu_custom_call.1} parent=1 // pred_check
      _
    $region11: #{tpu_custom_call.1} parent=1 // pred_check_branch
      %102 = sbr.rel (0) target = $region13
    $region12: #{tpu_custom_call.1} parent=1 // pred_region
      %s104 = ssub.s32 16, 16
      %105 = vsyncadd [#allocation3], %s104
      %s107 = sshll.u32 [#allocation2], 4
      %s108 = int_to_ptr.vmem [resolvable:$true] %s107
      %110 = dma.vmem_to_hbm [thread:$0]  %s108, 16, %s2, [#allocation3]
    $region13: #{tpu_custom_call.1} parent=1 // pred_fallthru
      _
    // Predicated region
    $region14: #{tpu_custom_call.1} parent=1 // pred_check
      _
    $region15: #{tpu_custom_call.1} parent=1 // pred_check_branch
      %112 = sbr.rel (0) target = $region17
    $region16: #{tpu_custom_call.1} parent=1 // pred_region
      %113 = dma.done [#allocation3], 16
    $region17: #{tpu_custom_call.1} parent=1 // pred_fallthru
      _
    %114 = vsyncpa [#allocation3], 1

</llo_original>
